<compile_context>
chip_gen: v6e
topology: v6e:2x2x1
jax: 0.10.0
libtpu: 0.0.40
codegen_flags: <defaults>
</compile_context>

<pallas_src>
import jax
import jax.numpy as jnp
from jax.experimental import pallas as pl
from jax.experimental.pallas import tpu as pltpu

_LANE = 128
_DEFAULT_BLOCK_BYTES = 4 * 1024 * 1024   # ~4 MiB per block (perf review target)
_VMEM_LIMIT_BYTES = 32 * 1024 * 1024     # covers 2x(in+out) double buffering everywhere


def _cdiv(a, b):
    return -(-a // b)


def _dropconnect_kernel(scale_ref, x_ref, o_ref):
    # scale_ref: (B, 1) f32 per-sample scale (0.0 dropped, 1/keep_prob kept).
    # x_ref / o_ref: (B, TILE) lane-dense slab spanning the whole batch.
    s = scale_ref[...].astype(x_ref.dtype)          # cast once, native-dtype multiply
    o_ref[...] = (x_ref[...] * s).astype(o_ref.dtype)


def drop_connect(x, seed, rate=0.5, training=True, block_bytes=_DEFAULT_BLOCK_BYTES):
    """JAX/Pallas equivalent of DropConnect.forward (NCHW input)."""
    if not 0 <= rate < 1:
        raise ValueError("rate must be 0<=rate<1, got {} instead".format(rate))
    keep_prob = 1.0 - rate

    if not training:
        return x

    if not jnp.issubdtype(x.dtype, jnp.floating):
        raise TypeError("drop_connect expects a floating dtype, got {}".format(x.dtype))

    orig_shape = x.shape
    B = int(orig_shape[0])
    chw = 1
    for d in orig_shape[1:]:
        chw *= int(d)

    # Per-sample mask computed once in the wrapper (mirrors
    # torch.rand([B,1,1,1]) -> floor(keep_prob + u) -> x/keep_prob * mask).
    key = jax.random.PRNGKey(seed)
    u = jax.random.uniform(key, (B, 1), dtype=jnp.float32)
    mask = jnp.floor(jnp.float32(keep_prob) + u)
    scale = mask * jnp.float32(1.0 / keep_prob)      # f32[B, 1]: 0.0 or 1/keep_prob

    # Un-padded, lane-dense tiling of the 2D view: each grid step handles a
    # (B, TILE) slab; TILE is a multiple of 128 (or the full feature dim), and
    # the ragged last block is masked by Pallas (no pad, no output slice).
    itemsize = x.dtype.itemsize
    tile_target = max(_LANE, (block_bytes // max(1, B * itemsize)) // _LANE * _LANE)
    if tile_target >= chw:
        tile = chw            # single step; legal even if chw isn't a multiple of 128
    else:
        tile = tile_target    # multiple of 128; last block ragged -> masked stores only
    grid_t = _cdiv(chw, tile)

    x2 = x.reshape(B, chw)
    out2 = pl.pallas_call(
        _dropconnect_kernel,
        out_shape=jax.ShapeDtypeStruct((B, chw), x.dtype),
        grid=(grid_t,),
        in_specs=[
            pl.BlockSpec((B, 1), lambda j: (0, 0)),      # scale: tiny, stays resident
            pl.BlockSpec((B, tile), lambda j: (0, j)),   # x slab
        ],
        out_specs=pl.BlockSpec((B, tile), lambda j: (0, j)),
        compiler_params=pltpu.CompilerParams(
            dimension_semantics=("parallel",),
            vmem_limit_bytes=_VMEM_LIMIT_BYTES,
        ),
    )(scale, x2)

    return out2.reshape(orig_shape)


if __name__ == "__main__":
    key = jax.random.PRNGKey(0)
    x = jax.random.normal(key, (2, 4, 16, 16), dtype=jnp.float32)

    rate = 0.5
    keep_prob = 1.0 - rate

    # Training path: each sample is either all-zero or exactly x / keep_prob.
    y_train = jax.block_until_ready(drop_connect(x, seed=0, rate=rate, training=True))
    assert y_train.shape == x.shape and y_train.dtype == x.dtype
    for b in range(x.shape[0]):
        yb = y_train[b]
        ok_zero = bool(jnp.all(yb == 0.0))
        ok_scaled = bool(jnp.allclose(yb, x[b] / keep_prob, atol=1e-6))
        assert ok_zero or ok_scaled, "sample {} neither dropped nor scaled".format(b)

    # Ragged-tile path: non-128-multiple feature count + tiny blocks forces a
    # multi-step grid whose final block is masked.
    x_odd = jax.random.normal(jax.random.PRNGKey(1), (2, 4, 16, 17), dtype=jnp.float32)
    y_odd = jax.block_until_ready(
        drop_connect(x_odd, seed=3, rate=rate, training=True, block_bytes=2048))
    for b in range(x_odd.shape[0]):
        yb = y_odd[b]
        ok_zero = bool(jnp.all(yb == 0.0))
        ok_scaled = bool(jnp.allclose(yb, x_odd[b] / keep_prob, atol=1e-6))
        assert ok_zero or ok_scaled, "odd sample {} neither dropped nor scaled".format(b)

    # Eval path: identity.
    y_eval = jax.block_until_ready(drop_connect(x, seed=0, rate=rate, training=False))
    assert bool(jnp.array_equal(y_eval, x))

    print("KERNEL_OK")
</pallas_src>

<mosaic_0001>
module attributes {stable_mosaic.version = 11 : i64} {
  func.func @_dropconnect_kernel(%arg0: i32, %arg1: memref<2x1xf32, #tpu.memory_space<vmem>>, %arg2: memref<2x1024xf32, #tpu.memory_space<vmem>>, %arg3: memref<2x1024xf32, #tpu.memory_space<vmem>>) attributes {dimension_semantics = [#tpu.dimension_semantics<parallel>], iteration_bounds = array<i64: 1>, scalar_prefetch = 0 : i64, scratch_operands = 0 : i64, tpu.core_type = #tpu.core_type<tc>, window_params = [{pipeline_mode = #tpu.pipeline_mode<synchronous>, transform_indices = @transform_0, window_bounds = array<i64: 2, 1>}, {transform_indices = @transform_1, window_bounds = array<i64: 2, 1024>}, {transform_indices = @transform_2, window_bounds = array<i64: 2, 1024>}]} {
    %c0 = arith.constant 0 : index
    %c0_0 = arith.constant 0 : index
    %0 = vector.load %arg1[%c0, %c0_0] : memref<2x1xf32, #tpu.memory_space<vmem>>, vector<2x1xf32>
    %c0_1 = arith.constant 0 : index
    %c0_2 = arith.constant 0 : index
    %1 = vector.load %arg2[%c0_1, %c0_2] : memref<2x1024xf32, #tpu.memory_space<vmem>>, vector<2x1024xf32>
    %2 = vector.broadcast %0 : vector<2x1xf32> to vector<2x1024xf32>
    %3 = arith.mulf %1, %2 : vector<2x1024xf32>
    %c0_3 = arith.constant 0 : index
    %c0_4 = arith.constant 0 : index
    %4 = vector.load %arg3[%c0_3, %c0_4] : memref<2x1024xf32, #tpu.memory_space<vmem>>, vector<2x1024xf32>
    tpu.vector_store %arg3[%c0_3, %c0_4], %3 {strides = array<i32>} : memref<2x1024xf32, #tpu.memory_space<vmem>>, vector<2x1024xf32>,
    return
  }
  func.func @transform_0(%arg0: i32) -> (i32, i32) {
    %c0_i32 = arith.constant 0 : i32
    %c0_i32_0 = arith.constant 0 : i32
    %c0_i32_1 = arith.constant 0 : i32
    return %c0_i32, %c0_i32_0 : i32, i32
  }
  func.func @transform_1(%arg0: i32) -> (i32, i32) {
    %c0_i32 = arith.constant 0 : i32
    %c0_i32_0 = arith.constant 0 : i32
    return %c0_i32, %arg0 : i32, i32
  }
  func.func @transform_2(%arg0: i32) -> (i32, i32) {
    %c0_i32 = arith.constant 0 : i32
    %c0_i32_0 = arith.constant 0 : i32
    return %c0_i32, %arg0 : i32, i32
  }
}

</mosaic_0001>

<llo_original>
// kernel: tpu_custom_call.1
$region0: #{tpu_custom_call.1}
  #allocation0 [shape = 'u32[]', space=smem, size = 0x4, offset = 0x4, fixed_abs, tag = 'smem constant byte address 0x4 - core index']
  #allocation1 [shape = 'u32[144,128]{1,0:T(1,128)}', space=vmem, size = 0x12000, scoped, tag = 'internal scratch']
  %s0 = inlined_call_operand.vmem [shape: f32[2,1], index: 0, kind: input, shape index: {}]
  %s1 = inlined_call_operand.hbm [shape: f32[2,1024], index: 1, kind: input, shape index: {}]
  %s2 = inlined_call_operand.hbm [shape: f32[2,1024], index: 2, kind: output, shape index: {}]
  %s3 = sld [smem:[#allocation0]]
  $region22: #{tpu_custom_call.1} parent=0
    _
  %s5 = ssub.s32 1, %s3
  %s6 = scalar_select 0, %s5, %s3
  $region1: #{tpu_custom_call.1} parent=0
    #allocation2 [shape = 'u8[8192]{0}', space=vmem, size = 0x2000, scoped, tag = 'input window, operand 1, single buffered']
    #allocation3 [shape = 's32[1]{0}', space=sflag, size = 0x4, scoped, tag = 'scoped memory for tpu_custom_call.1']
    #allocation4 [shape = 's32[1]{0}', space=sflag, size = 0x4, scoped, tag = 'scoped memory for tpu_custom_call.1']
    #allocation5 [shape = 'u8[8192]{0}', space=vmem, size = 0x2000, scoped, tag = 'output window, operand 0, single buffered']
    %7 = vsyncpa [#allocation3], 0
    %8 = vsyncpa [#allocation4], 0
    // Predicated region
    $region2: #{tpu_custom_call.1} parent=1 // pred_check
      _
    $region3: #{tpu_custom_call.1} parent=1 // pred_check_branch
      %10 = sbr.rel (0) target = $region5
    $region4: #{tpu_custom_call.1} parent=1 // pred_region
      _
    $region5: #{tpu_custom_call.1} parent=1 // pred_fallthru
      _
    // Predicated region
    $region6: #{tpu_custom_call.1} parent=1 // pred_check
      _
    $region7: #{tpu_custom_call.1} parent=1 // pred_check_branch
      %12 = sbr.rel (0) target = $region9
    $region8: #{tpu_custom_call.1} parent=1 // pred_region
      %s14 = ssub.s32 256, 256
      %15 = vsyncadd [#allocation3], %s14
      %s17 = sshll.u32 [#allocation2], 4
      %s18 = int_to_ptr.vmem [resolvable:$true] %s17
      %20 = dma.hbm_to_vmem [thread:$0]  %s1, 256, %s18, [#allocation3]
    $region9: #{tpu_custom_call.1} parent=1 // pred_fallthru
      _
    // Predicated region
    $region10: #{tpu_custom_call.1} parent=1 // pred_check
      _
    $region11: #{tpu_custom_call.1} parent=1 // pred_check_branch
      %22 = sbr.rel (0) target = $region13
    $region12: #{tpu_custom_call.1} parent=1 // pred_region
      %23 = dma.done [#allocation3], 256
    $region13: #{tpu_custom_call.1} parent=1 // pred_fallthru
      _
    %v24 = vld [vmem:[%s0] sm:$0x3]
    %v25 = vld [vmem:[#allocation2] sm:$0xff]
    %v26 = vld [vmem:[#allocation2 + $0x8] sm:$0xff]
    %28 = vset.pattern.permute.xlu0 0
    %29 = vperm.xlu0 %28, %v24
    %v30 = vpop.permute.xlu0 %29
    %v32 = vunpack.c.l.s4 269488144
    %v33 = vunpack.c.0.s8 %v32
    %v34 = vlaneseq
    %v35 = vshrl.u32 %v34, 7
    %v36 = vsub.s32 %v33, %v35
    %v37 = vrot.slane %v30, %v36
    %v39 = vmul.f32 %v25, %v37
    %v40 = vmul.f32 %v26, %v37
    %41 = vst [vmem:[#allocation5] sm:$0xff] %v39
    %42 = vst [vmem:[#allocation5 + $0x8] sm:$0xff] %v40
    // Predicated region
    $region14: #{tpu_custom_call.1} parent=1 // pred_check
      _
    $region15: #{tpu_custom_call.1} parent=1 // pred_check_branch
      %44 = sbr.rel (0) target = $region17
    $region16: #{tpu_custom_call.1} parent=1 // pred_region
      %s46 = ssub.s32 256, 256
      %47 = vsyncadd [#allocation4], %s46
      %s49 = sshll.u32 [#allocation5], 4
      %s50 = int_to_ptr.vmem [resolvable:$true] %s49
      %52 = dma.vmem_to_hbm [thread:$0]  %s50, 256, %s2, [#allocation4]
    $region17: #{tpu_custom_call.1} parent=1 // pred_fallthru
      _
    // Predicated region
    $region18: #{tpu_custom_call.1} parent=1 // pred_check
      _
    $region19: #{tpu_custom_call.1} parent=1 // pred_check_branch
      %54 = sbr.rel (0) target = $region21
    $region20: #{tpu_custom_call.1} parent=1 // pred_region
      %55 = dma.done [#allocation4], 256
    $region21: #{tpu_custom_call.1} parent=1 // pred_fallthru
      _
    %56 = vsyncpa [#allocation3], 1
    %57 = vsyncpa [#allocation4], 1

</llo_original>
